<compile_context>
chip_gen: v7x
topology: tpu7x:2x2x1
jax: 0.10.0
libtpu: 0.0.40
codegen_flags: <defaults>
</compile_context>

<pallas_src>
import functools

import jax
import jax.numpy as jnp
from jax import lax
from jax.experimental import pallas as pl
from jax.experimental.pallas import tpu as pltpu


def _miou_kernel(predict_ref, target_ref, out_ref,
                 tp_acc, p_acc, t_acc,
                 *, smooth, num_classes, batch_size, c_pad):
    tile = pl.program_id(0)

    @pl.when(tile == 0)
    def _init():
        tp_acc[...] = jnp.zeros_like(tp_acc)
        p_acc[...] = jnp.zeros_like(p_acc)
        t_acc[...] = jnp.zeros_like(t_acc)

    pred = predict_ref[...]            # [bs, tile_n] int32
    targ = target_ref[...]             # [bs, tile_n] int32

    # Classes 1 .. c_pad on the lane axis (class 0 is skipped by construction;
    # padded labels are 0 so they never match and contribute nothing).
    cls = lax.broadcasted_iota(jnp.int32, (1, 1, c_pad), 2) + 1

    p_oh = pred[:, :, None] == cls     # [bs, tile_n, c_pad] bool one-hot
    t_oh = targ[:, :, None] == cls

    # Integer partial reductions over the tile axis, accumulated per (batch, class)
    # in VMEM.  No f32 math in the streaming loop.
    tp_acc[...] += jnp.sum((p_oh & t_oh).astype(jnp.int32), axis=1)   # [bs, c_pad]
    p_acc[...] += jnp.sum(p_oh.astype(jnp.int32), axis=1)
    t_acc[...] += jnp.sum(t_oh.astype(jnp.int32), axis=1)

    @pl.when(tile == pl.num_programs(0) - 1)
    def _epilogue():
        tp = tp_acc[...].astype(jnp.float32)
        ps = p_acc[...].astype(jnp.float32)
        ts = t_acc[...].astype(jnp.float32)
        iou = (tp + smooth) / (ps + ts - tp + smooth)                 # [bs, c_pad]
        # Only columns 0 .. num_classes-2 (classes 1 .. num_classes-1) are real.
        col = lax.broadcasted_iota(jnp.int32, iou.shape, 1)
        valid = col < (num_classes - 1)
        total = jnp.sum(jnp.where(valid, iou, 0.0))
        out_ref[0, 0] = total / float(batch_size * (num_classes - 1))


def miou_pallas(predict, target, smooth=0.01, num_classes=21, tile_n=None):
    """predict, target: integer label maps of shape [bs, N]. Returns scalar f32 mIoU."""
    predict = predict.astype(jnp.int32)
    target = target.astype(jnp.int32)
    bs, N = predict.shape
    assert num_classes - 1 <= 128, "kernel packs foreground classes onto 128 lanes"
    c_pad = 128

    # Lane-aligned N tile; cap it so the [bs, tile_n, 128] one-hot intermediates and
    # double-buffered input tiles stay well within VMEM (v7x-safe).
    if tile_n is None:
        tile_n = min(N, 2048)
    tile_n = max(128, ((tile_n + 127) // 128) * 128)
    n_pad = ((N + tile_n - 1) // tile_n) * tile_n
    if n_pad != N:
        # Pad with class 0, which is excluded from the metric -> contributes nothing.
        predict = jnp.pad(predict, ((0, 0), (0, n_pad - N)), constant_values=0)
        target = jnp.pad(target, ((0, 0), (0, n_pad - N)), constant_values=0)
    num_tiles = n_pad // tile_n

    kernel = functools.partial(
        _miou_kernel,
        smooth=float(smooth),          # Python literal, not a captured traced array
        num_classes=int(num_classes),
        batch_size=int(bs),
        c_pad=c_pad,
    )

    out = pl.pallas_call(
        kernel,
        out_shape=jax.ShapeDtypeStruct((1, 1), jnp.float32),
        grid_spec=pltpu.PrefetchScalarGridSpec(
            num_scalar_prefetch=0,
            grid=(num_tiles,),
            in_specs=[
                pl.BlockSpec((bs, tile_n), lambda i: (0, i)),
                pl.BlockSpec((bs, tile_n), lambda i: (0, i)),
            ],
            out_specs=pl.BlockSpec(memory_space=pltpu.SMEM),
            scratch_shapes=[
                pltpu.VMEM((bs, c_pad), jnp.int32),   # tp counts
                pltpu.VMEM((bs, c_pad), jnp.int32),   # predict counts
                pltpu.VMEM((bs, c_pad), jnp.int32),   # target counts
            ],
        ),
        compiler_params=pltpu.CompilerParams(
            dimension_semantics=("arbitrary",)),      # accumulators carry across tiles
    )(predict, target)
    return out[0, 0]


def miou_ref(predict, target, smooth=0.01, num_classes=21):
    """Pure-JAX reference mirroring the PyTorch module exactly."""
    ious = []
    for cls in range(1, num_classes):
        p = (predict == cls).astype(jnp.float32)
        t = (target == cls).astype(jnp.float32)
        tp = jnp.sum(p * t, axis=1)
        iou = (tp + smooth) / (jnp.sum(p, axis=1) + jnp.sum(t, axis=1) - tp + smooth)
        ious.append(iou)
    return jnp.mean(jnp.stack(ious, axis=1))


if __name__ == "__main__":
    num_classes = 21
    smooth = 0.01
    bs, N = 2, 256  # [bs, N] label maps

    key = jax.random.PRNGKey(0)
    kp, kt = jax.random.split(key)
    predict = jax.random.randint(kp, (bs, N), 0, num_classes, dtype=jnp.int32)
    target = jax.random.randint(kt, (bs, N), 0, num_classes, dtype=jnp.int32)

    result = miou_pallas(predict, target, smooth=smooth, num_classes=num_classes)
    result = jax.block_until_ready(result)

    expected = miou_ref(predict, target, smooth=smooth, num_classes=num_classes)
    assert jnp.allclose(result, expected, rtol=1e-5, atol=1e-6), (result, expected)

    print("KERNEL_OK")
</pallas_src>

<mosaic_0001>
module attributes {stable_mosaic.version = 11 : i64} {
  func.func @_miou_kernel(%arg0: i32, %arg1: memref<2x256xi32, #tpu.memory_space<vmem>>, %arg2: memref<2x256xi32, #tpu.memory_space<vmem>>, %arg3: memref<1x1xf32, #tpu.memory_space<smem>>, %arg4: memref<2x128xi32, #tpu.memory_space<vmem>>, %arg5: memref<2x128xi32, #tpu.memory_space<vmem>>, %arg6: memref<2x128xi32, #tpu.memory_space<vmem>>) attributes {dimension_semantics = [#tpu.dimension_semantics<arbitrary>], iteration_bounds = array<i64: 1>, scalar_prefetch = 0 : i64, scratch_operands = 3 : i64, tpu.core_type = #tpu.core_type<tc>, window_params = [{transform_indices = @transform_0, window_bounds = array<i64: 2, 256>}, {transform_indices = @transform_1, window_bounds = array<i64: 2, 256>}, {transform_indices = @transform_2, window_bounds = array<i64: 1, 1>}]} {
    %c0_i32 = arith.constant 0 : i32
    %0 = arith.cmpi eq, %arg0, %c0_i32 : i32
    %1 = arith.extui %0 : i1 to i32
    %c0_i32_0 = arith.constant 0 : i32
    %2 = arith.cmpi ne, %1, %c0_i32_0 : i32
    scf.if %2 {
      %c0_i32_20 = arith.constant 0 : i32
      %35 = vector.broadcast %c0_i32_20 : i32 to vector<2x128xi32>
      %c0_21 = arith.constant 0 : index
      %c0_22 = arith.constant 0 : index
      %36 = vector.load %arg4[%c0_21, %c0_22] : memref<2x128xi32, #tpu.memory_space<vmem>>, vector<2x128xi32>
      tpu.vector_store %arg4[%c0_21, %c0_22], %35 {strides = array<i32>} : memref<2x128xi32, #tpu.memory_space<vmem>>, vector<2x128xi32>,
      %c0_i32_23 = arith.constant 0 : i32
      %37 = vector.broadcast %c0_i32_23 : i32 to vector<2x128xi32>
      %c0_24 = arith.constant 0 : index
      %c0_25 = arith.constant 0 : index
      %38 = vector.load %arg5[%c0_24, %c0_25] : memref<2x128xi32, #tpu.memory_space<vmem>>, vector<2x128xi32>
      tpu.vector_store %arg5[%c0_24, %c0_25], %37 {strides = array<i32>} : memref<2x128xi32, #tpu.memory_space<vmem>>, vector<2x128xi32>,
      %c0_i32_26 = arith.constant 0 : i32
      %39 = vector.broadcast %c0_i32_26 : i32 to vector<2x128xi32>
      %c0_27 = arith.constant 0 : index
      %c0_28 = arith.constant 0 : index
      %40 = vector.load %arg6[%c0_27, %c0_28] : memref<2x128xi32, #tpu.memory_space<vmem>>, vector<2x128xi32>
      tpu.vector_store %arg6[%c0_27, %c0_28], %39 {strides = array<i32>} : memref<2x128xi32, #tpu.memory_space<vmem>>, vector<2x128xi32>,
    } else {
    }
    %c0 = arith.constant 0 : index
    %c0_1 = arith.constant 0 : index
    %3 = vector.load %arg1[%c0, %c0_1] : memref<2x256xi32, #tpu.memory_space<vmem>>, vector<2x256xi32>
    %c0_2 = arith.constant 0 : index
    %c0_3 = arith.constant 0 : index
    %4 = vector.load %arg2[%c0_2, %c0_3] : memref<2x256xi32, #tpu.memory_space<vmem>>, vector<2x256xi32>
    %5 = tpu.iota {dimensions = array<i32: 2>} : vector<1x1x128xi32>
    %c1_i32 = arith.constant 1 : i32
    %6 = vector.broadcast %c1_i32 : i32 to vector<1x1x128xi32>
    %7 = arith.addi %5, %6 : vector<1x1x128xi32>
    %8 = vector.shape_cast %3 : vector<2x256xi32> to vector<2x256x1xi32>
    %9 = vector.broadcast %8 : vector<2x256x1xi32> to vector<2x256x128xi32>
    %10 = vector.broadcast %7 : vector<1x1x128xi32> to vector<2x256x128xi32>
    %11 = arith.cmpi eq, %9, %10 : vector<2x256x128xi32>
    %12 = vector.shape_cast %4 : vector<2x256xi32> to vector<2x256x1xi32>
    %13 = vector.broadcast %12 : vector<2x256x1xi32> to vector<2x256x128xi32>
    %14 = vector.broadcast %7 : vector<1x1x128xi32> to vector<2x256x128xi32>
    %15 = arith.cmpi eq, %13, %14 : vector<2x256x128xi32>
    %c0_4 = arith.constant 0 : index
    %c0_5 = arith.constant 0 : index
    %16 = vector.load %arg4[%c0_4, %c0_5] : memref<2x128xi32, #tpu.memory_space<vmem>>, vector<2x128xi32>
    %17 = arith.andi %11, %15 : vector<2x256x128xi1>
    %18 = arith.extui %17 : vector<2x256x128xi1> to vector<2x256x128xi32>
    %cst = arith.constant dense<0> : vector<2x128xi32>
    %19 = vector.multi_reduction <add>, %18, %cst [1] : vector<2x256x128xi32> to vector<2x128xi32>
    %20 = arith.addi %16, %19 : vector<2x128xi32>
    %c0_6 = arith.constant 0 : index
    %c0_7 = arith.constant 0 : index
    %21 = vector.load %arg4[%c0_6, %c0_7] : memref<2x128xi32, #tpu.memory_space<vmem>>, vector<2x128xi32>
    tpu.vector_store %arg4[%c0_6, %c0_7], %20 {strides = array<i32>} : memref<2x128xi32, #tpu.memory_space<vmem>>, vector<2x128xi32>,
    %c0_8 = arith.constant 0 : index
    %c0_9 = arith.constant 0 : index
    %22 = vector.load %arg5[%c0_8, %c0_9] : memref<2x128xi32, #tpu.memory_space<vmem>>, vector<2x128xi32>
    %23 = arith.extui %11 : vector<2x256x128xi1> to vector<2x256x128xi32>
    %cst_10 = arith.constant dense<0> : vector<2x128xi32>
    %24 = vector.multi_reduction <add>, %23, %cst_10 [1] : vector<2x256x128xi32> to vector<2x128xi32>
    %25 = arith.addi %22, %24 : vector<2x128xi32>
    %c0_11 = arith.constant 0 : index
    %c0_12 = arith.constant 0 : index
    %26 = vector.load %arg5[%c0_11, %c0_12] : memref<2x128xi32, #tpu.memory_space<vmem>>, vector<2x128xi32>
    tpu.vector_store %arg5[%c0_11, %c0_12], %25 {strides = array<i32>} : memref<2x128xi32, #tpu.memory_space<vmem>>, vector<2x128xi32>,
    %c0_13 = arith.constant 0 : index
    %c0_14 = arith.constant 0 : index
    %27 = vector.load %arg6[%c0_13, %c0_14] : memref<2x128xi32, #tpu.memory_space<vmem>>, vector<2x128xi32>
    %28 = arith.extui %15 : vector<2x256x128xi1> to vector<2x256x128xi32>
    %cst_15 = arith.constant dense<0> : vector<2x128xi32>
    %29 = vector.multi_reduction <add>, %28, %cst_15 [1] : vector<2x256x128xi32> to vector<2x128xi32>
    %30 = arith.addi %27, %29 : vector<2x128xi32>
    %c0_16 = arith.constant 0 : index
    %c0_17 = arith.constant 0 : index
    %31 = vector.load %arg6[%c0_16, %c0_17] : memref<2x128xi32, #tpu.memory_space<vmem>>, vector<2x128xi32>
    tpu.vector_store %arg6[%c0_16, %c0_17], %30 {strides = array<i32>} : memref<2x128xi32, #tpu.memory_space<vmem>>, vector<2x128xi32>,
    %c0_i32_18 = arith.constant 0 : i32
    %32 = arith.cmpi eq, %arg0, %c0_i32_18 : i32
    %33 = arith.extui %32 : i1 to i32
    %c0_i32_19 = arith.constant 0 : i32
    %34 = arith.cmpi ne, %33, %c0_i32_19 : i32
    scf.if %34 {
      %c0_20 = arith.constant 0 : index
      %c0_21 = arith.constant 0 : index
      %35 = vector.load %arg4[%c0_20, %c0_21] : memref<2x128xi32, #tpu.memory_space<vmem>>, vector<2x128xi32>
      %36 = arith.sitofp %35 : vector<2x128xi32> to vector<2x128xf32>
      %c0_22 = arith.constant 0 : index
      %c0_23 = arith.constant 0 : index
      %37 = vector.load %arg5[%c0_22, %c0_23] : memref<2x128xi32, #tpu.memory_space<vmem>>, vector<2x128xi32>
      %38 = arith.sitofp %37 : vector<2x128xi32> to vector<2x128xf32>
      %c0_24 = arith.constant 0 : index
      %c0_25 = arith.constant 0 : index
      %39 = vector.load %arg6[%c0_24, %c0_25] : memref<2x128xi32, #tpu.memory_space<vmem>>, vector<2x128xi32>
      %40 = arith.sitofp %39 : vector<2x128xi32> to vector<2x128xf32>
      %cst_26 = arith.constant 0.00999999977 : f32
      %41 = vector.broadcast %cst_26 : f32 to vector<2x128xf32>
      %42 = arith.addf %36, %41 : vector<2x128xf32>
      %43 = arith.addf %38, %40 : vector<2x128xf32>
      %44 = arith.subf %43, %36 : vector<2x128xf32>
      %cst_27 = arith.constant 0.00999999977 : f32
      %45 = vector.broadcast %cst_27 : f32 to vector<2x128xf32>
      %46 = arith.addf %44, %45 : vector<2x128xf32>
      %47 = arith.divf %42, %46 : vector<2x128xf32>
      %48 = tpu.iota {dimensions = array<i32: 1>} : vector<2x128xi32>
      %c20_i32 = arith.constant 20 : i32
      %49 = vector.broadcast %c20_i32 : i32 to vector<2x128xi32>
      %50 = arith.cmpi slt, %48, %49 : vector<2x128xi32>
      %cst_28 = arith.constant 0.000000e+00 : f32
      %51 = vector.broadcast %cst_28 : f32 to vector<2x128xf32>
      %52 = arith.select %50, %47, %51 : vector<2x128xi1>, vector<2x128xf32>
      %53 = vector.shape_cast %52 : vector<2x128xf32> to vector<1x2x128xf32>
      %cst_29 = arith.constant dense<0.000000e+00> : vector<1xf32>
      %54 = vector.multi_reduction <add>, %53, %cst_29 [1, 2] : vector<1x2x128xf32> to vector<1xf32>
      %55 = vector.shape_cast %54 : vector<1xf32> to vector<1x1x1xf32>
      %56 = vector.extract %55[0, 0, 0] : f32 from vector<1x1x1xf32>
      %cst_30 = arith.constant 4.000000e+01 : f32
      %57 = arith.divf %56, %cst_30 : f32
      %c0_31 = arith.constant 0 : index
      %c0_32 = arith.constant 0 : index
      %58 = memref.load %arg3[%c0_31, %c0_32] : memref<1x1xf32, #tpu.memory_space<smem>>
      memref.store %57, %arg3[%c0_31, %c0_32] : memref<1x1xf32, #tpu.memory_space<smem>>
    } else {
    }
    return
  }
  func.func @transform_0(%arg0: i32) -> (i32, i32) {
    %c0_i32 = arith.constant 0 : i32
    %c0_i32_0 = arith.constant 0 : i32
    return %c0_i32, %arg0 : i32, i32
  }
  func.func @transform_1(%arg0: i32) -> (i32, i32) {
    %c0_i32 = arith.constant 0 : i32
    %c0_i32_0 = arith.constant 0 : i32
    return %c0_i32, %arg0 : i32, i32
  }
  func.func @transform_2(%arg0: i32) -> (i32, i32) {
    %c0_i32 = arith.constant 0 : i32
    %c0_i32_0 = arith.constant 0 : i32
    %c0_i32_1 = arith.constant 0 : i32
    return %c0_i32, %c0_i32_0 : i32, i32
  }
}

</mosaic_0001>

<llo_original>
// kernel: tpu_custom_call.1
$region0: #{tpu_custom_call.1}
  #allocation0 [shape = 'u32[]', space=smem, size = 0x4, offset = 0x4, fixed_abs, tag = 'smem constant byte address 0x4 - core index']
  #allocation1 [shape = 'u32[144,128]{1,0:T(1,128)}', space=vmem, size = 0x12000, scoped, tag = 'internal scratch']
  #allocation2 [shape = 's32[2,128]{1,0:T(2,128)}', space=vmem, size = 0x400, scoped, tag = 'scratch operand']
  #allocation3 [shape = 's32[2,128]{1,0:T(2,128)}', space=vmem, size = 0x400, scoped, tag = 'scratch operand']
  #allocation4 [shape = 's32[2,128]{1,0:T(2,128)}', space=vmem, size = 0x400, scoped, tag = 'scratch operand']
  %s0 = inlined_call_operand.hbm [shape: s32[2,256], index: 0, kind: input, shape index: {}]
  %s1 = inlined_call_operand.hbm [shape: s32[2,256], index: 1, kind: input, shape index: {}]
  %s2 = inlined_call_operand.hbm [shape: f32[1,1], index: 2, kind: output, shape index: {}]
  %s3 = sld [smem:[#allocation0]]
  $region34: #{tpu_custom_call.1} parent=0
    _
  %s5 = ssub.s32 1, %s3
  %s6 = scalar_select 0, %s5, %s3
  $region1: #{tpu_custom_call.1} parent=0
    #allocation5 [shape = 'u8[2048]{0}', space=vmem, size = 0x800, scoped, tag = 'input window, operand 0, single buffered']
    #allocation6 [shape = 's32[1]{0}', space=sflag, size = 0x4, scoped, tag = 'scoped memory for tpu_custom_call.1']
    #allocation7 [shape = 's32[1]{0}', space=sflag, size = 0x4, scoped, tag = 'scoped memory for tpu_custom_call.1']
    #allocation8 [shape = 'u8[2048]{0}', space=vmem, size = 0x800, scoped, tag = 'input window, operand 1, single buffered']
    #allocation9 [shape = 's32[1]{0}', space=sflag, size = 0x4, scoped, tag = 'scoped memory for tpu_custom_call.1']
    #allocation10 [shape = 'u8[512]{0}', space=smem, size = 0x200, scoped, tag = 'output window, operand 0, single buffered']
    %7 = vsyncpa [#allocation6], 0
    %8 = vsyncpa [#allocation9], 0
    %9 = vsyncpa [#allocation7], 0
    // Predicated region
    $region2: #{tpu_custom_call.1} parent=1 // pred_check
      _
    $region3: #{tpu_custom_call.1} parent=1 // pred_check_branch
      %11 = sbr.rel (0) target = $region5
    $region4: #{tpu_custom_call.1} parent=1 // pred_region
      %s13 = ssub.s32 64, 64
      %14 = vsyncadd [#allocation6], %s13
      %s16 = sshll.u32 [#allocation5], 4
      %s17 = int_to_ptr.vmem [resolvable:$true] %s16
      %19 = dma.hbm_to_vmem [thread:$0]  %s0, 64, %s17, [#allocation6]
    $region5: #{tpu_custom_call.1} parent=1 // pred_fallthru
      _
    // Predicated region
    $region6: #{tpu_custom_call.1} parent=1 // pred_check
      _
    $region7: #{tpu_custom_call.1} parent=1 // pred_check_branch
      %21 = sbr.rel (0) target = $region9
    $region8: #{tpu_custom_call.1} parent=1 // pred_region
      %s23 = ssub.s32 64, 64
      %24 = vsyncadd [#allocation9], %s23
      %s26 = sshll.u32 [#allocation8], 4
      %s27 = int_to_ptr.vmem [resolvable:$true] %s26
      %29 = dma.hbm_to_vmem [thread:$0]  %s1, 64, %s27, [#allocation9]
    $region9: #{tpu_custom_call.1} parent=1 // pred_fallthru
      _
    // Predicated region
    $region10: #{tpu_custom_call.1} parent=1 // pred_check
      _
    $region11: #{tpu_custom_call.1} parent=1 // pred_check_branch
      %31 = sbr.rel (0) target = $region13
    $region12: #{tpu_custom_call.1} parent=1 // pred_region
      %32 = dma.done [#allocation6], 64
    $region13: #{tpu_custom_call.1} parent=1 // pred_fallthru
      _
    // Predicated region
    $region14: #{tpu_custom_call.1} parent=1 // pred_check
      _
    $region15: #{tpu_custom_call.1} parent=1 // pred_check_branch
      %34 = sbr.rel (0) target = $region17
    $region16: #{tpu_custom_call.1} parent=1 // pred_region
      %35 = dma.done [#allocation9], 64
    $region17: #{tpu_custom_call.1} parent=1 // pred_fallthru
      _
    %p36 = scmp.eq.s32.totalorder 0, 0
    // Predicated region
    $region18: #{tpu_custom_call.1} parent=1 // pred_check
      %p37 = pneg %p36
    $region19: #{tpu_custom_call.1} parent=1 // pred_check_branch
      %39 = sbr.rel (%p37) target = $region21
    $region20: #{tpu_custom_call.1} parent=1 // pred_region
      %40 = vst [vmem:[#allocation2] sm:$0x3] 0
      %41 = vst [vmem:[#allocation3] sm:$0x3] 0
      %42 = vst [vmem:[#allocation4] sm:$0x3] 0
    $region21: #{tpu_custom_call.1} parent=1 // pred_fallthru
      _
    %v43 = vld [vmem:[#allocation5] sm:$0xf]
    %v44 = vld [vmem:[#allocation8] sm:$0xf]
    %v45 = vlaneseq
    %v46 = vand.u32 %v45, 127
    %v47 = vadd.s32 %v46, 1
    %v49 = vunpack.c.l.s4 1983009808
    %v50 = vunpack.c.0.s8 %v49
    %v51 = vlaneseq
    %v52 = vshrl.u32 %v51, 7
    %v53 = vsub.s32 %v50, %v52
    %v54 = vrot.slane %v43, %v53
    %v55 = vcombine.high %v54, %v54
    %v56 = vlaneseq
    %v57 = vshrl.u32 %v56, 7
    %v58 = vsub.s32 0, %v57
    %v59 = vrot.slane %v54, %v58
    %61 = vbcast.lane.b32.xlu0 %v59, 256
    %v62 = vpop.permute.xlu0 %61
    %s64 = sor.u32 256, 8
    %65 = vbcast.lane.b32.xlu0 %v59, %s64
    %v66 = vpop.permute.xlu0 %65
    %s68 = sor.u32 256, 16
    %69 = vbcast.lane.b32.xlu0 %v59, %s68
    %v70 = vpop.permute.xlu0 %69
    %s72 = sor.u32 256, 24
    %73 = vbcast.lane.b32.xlu0 %v59, %s72
    %v74 = vpop.permute.xlu0 %73
    %s76 = sor.u32 256, 32
    %77 = vbcast.lane.b32.xlu0 %v59, %s76
    %v78 = vpop.permute.xlu0 %77
    %s80 = sor.u32 256, 40
    %81 = vbcast.lane.b32.xlu0 %v59, %s80
    %v82 = vpop.permute.xlu0 %81
    %s84 = sor.u32 256, 48
    %85 = vbcast.lane.b32.xlu0 %v59, %s84
    %v86 = vpop.permute.xlu0 %85
    %s88 = sor.u32 256, 56
    %89 = vbcast.lane.b32.xlu0 %v59, %s88
    %v90 = vpop.permute.xlu0 %89
    %s92 = sor.u32 256, 64
    %93 = vbcast.lane.b32.xlu0 %v59, %s92
    %v94 = vpop.permute.xlu0 %93
    %s96 = sor.u32 256, 72
    %97 = vbcast.lane.b32.xlu0 %v59, %s96
    %v98 = vpop.permute.xlu0 %97
    %s100 = sor.u32 256, 80
    %101 = vbcast.lane.b32.xlu0 %v59, %s100
    %v102 = vpop.permute.xlu0 %101
    %s104 = sor.u32 256, 88
    %105 = vbcast.lane.b32.xlu0 %v59, %s104
    %v106 = vpop.permute.xlu0 %105
    %s108 = sor.u32 256, 96
    %109 = vbcast.lane.b32.xlu0 %v59, %s108
    %v110 = vpop.permute.xlu0 %109
    %s112 = sor.u32 256, 104
    %113 = vbcast.lane.b32.xlu0 %v59, %s112
    %v114 = vpop.permute.xlu0 %113
    %s116 = sor.u32 256, 112
    %117 = vbcast.lane.b32.xlu0 %v59, %s116
    %v118 = vpop.permute.xlu0 %117
    %s120 = sor.u32 256, 120
    %121 = vbcast.lane.b32.xlu0 %v59, %s120
    %v122 = vpop.permute.xlu0 %121
    %v123 = vlaneseq
    %v124 = vshrl.u32 %v123, 7
    %v125 = vsub.s32 0, %v124
    %v126 = vrot.slane %v55, %v125
    %128 = vbcast.lane.b32.xlu0 %v126, 256
    %v129 = vpop.permute.xlu0 %128
    %s131 = sor.u32 256, 8
    %132 = vbcast.lane.b32.xlu0 %v126, %s131
    %v133 = vpop.permute.xlu0 %132
    %s135 = sor.u32 256, 16
    %136 = vbcast.lane.b32.xlu0 %v126, %s135
    %v137 = vpop.permute.xlu0 %136
    %s139 = sor.u32 256, 24
    %140 = vbcast.lane.b32.xlu0 %v126, %s139
    %v141 = vpop.permute.xlu0 %140
    %s143 = sor.u32 256, 32
    %144 = vbcast.lane.b32.xlu0 %v126, %s143
    %v145 = vpop.permute.xlu0 %144
    %s147 = sor.u32 256, 40
    %148 = vbcast.lane.b32.xlu0 %v126, %s147
    %v149 = vpop.permute.xlu0 %148
    %s151 = sor.u32 256, 48
    %152 = vbcast.lane.b32.xlu0 %v126, %s151
    %v153 = vpop.permute.xlu0 %152
    %s155 = sor.u32 256, 56
    %156 = vbcast.lane.b32.xlu0 %v126, %s155
    %v157 = vpop.permute.xlu0 %156
    %s159 = sor.u32 256, 64
    %160 = vbcast.lane.b32.xlu0 %v126, %s159
    %v161 = vpop.permute.xlu0 %160
    %s163 = sor.u32 256, 72
    %164 = vbcast.lane.b32.xlu0 %v126, %s163
    %v165 = vpop.permute.xlu0 %164
    %s167 = sor.u32 256, 80
    %168 = vbcast.lane.b32.xlu0 %v126, %s167
    %v169 = vpop.permute.xlu0 %168
    %s171 = sor.u32 256, 88
    %172 = vbcast.lane.b32.xlu0 %v126, %s171
    %v173 = vpop.permute.xlu0 %172
    %s175 = sor.u32 256, 96
    %176 = vbcast.lane.b32.xlu0 %v126, %s175
    %v177 = vpop.permute.xlu0 %176
    %s179 = sor.u32 256, 104
    %180 = vbcast.lane.b32.xlu0 %v126, %s179
    %v181 = vpop.permute.xlu0 %180
    %s183 = sor.u32 256, 112
    %184 = vbcast.lane.b32.xlu0 %v126, %s183
    %v185 = vpop.permute.xlu0 %184
    %s187 = sor.u32 256, 120
    %188 = vbcast.lane.b32.xlu0 %v126, %s187
    %v189 = vpop.permute.xlu0 %188
    %v190 = vlaneseq
    %v191 = vshrl.u32 %v190, 7
    %v192 = vsub.s32 1, %v191
    %v193 = vrot.slane %v54, %v192
    %195 = vbcast.lane.b32.xlu0 %v193, 256
    %v196 = vpop.permute.xlu0 %195
    %s198 = sor.u32 256, 8
    %199 = vbcast.lane.b32.xlu0 %v193, %s198
    %v200 = vpop.permute.xlu0 %199
    %s202 = sor.u32 256, 16
    %203 = vbcast.lane.b32.xlu0 %v193, %s202
    %v204 = vpop.permute.xlu0 %203
    %s206 = sor.u32 256, 24
    %207 = vbcast.lane.b32.xlu0 %v193, %s206
    %v208 = vpop.permute.xlu0 %207
    %s210 = sor.u32 256, 32
    %211 = vbcast.lane.b32.xlu0 %v193, %s210
    %v212 = vpop.permute.xlu0 %211
    %s214 = sor.u32 256, 40
    %215 = vbcast.lane.b32.xlu0 %v193, %s214
    %v216 = vpop.permute.xlu0 %215
    %s218 = sor.u32 256, 48
    %219 = vbcast.lane.b32.xlu0 %v193, %s218
    %v220 = vpop.permute.xlu0 %219
    %s222 = sor.u32 256, 56
    %223 = vbcast.lane.b32.xlu0 %v193, %s222
    %v224 = vpop.permute.xlu0 %223
    %s226 = sor.u32 256, 64
    %227 = vbcast.lane.b32.xlu0 %v193, %s226
    %v228 = vpop.permute.xlu0 %227
    %s230 = sor.u32 256, 72
    %231 = vbcast.lane.b32.xlu0 %v193, %s230
    %v232 = vpop.permute.xlu0 %231
    %s234 = sor.u32 256, 80
    %235 = vbcast.lane.b32.xlu0 %v193, %s234
    %v236 = vpop.permute.xlu0 %235
    %s238 = sor.u32 256, 88
    %239 = vbcast.lane.b32.xlu0 %v193, %s238
    %v240 = vpop.permute.xlu0 %239
    %s242 = sor.u32 256, 96
    %243 = vbcast.lane.b32.xlu0 %v193, %s242
    %v244 = vpop.permute.xlu0 %243
    %s246 = sor.u32 256, 104
    %247 = vbcast.lane.b32.xlu0 %v193, %s246
    %v248 = vpop.permute.xlu0 %247
    %s250 = sor.u32 256, 112
    %251 = vbcast.lane.b32.xlu0 %v193, %s250
    %v252 = vpop.permute.xlu0 %251
    %s254 = sor.u32 256, 120
    %255 = vbcast.lane.b32.xlu0 %v193, %s254
    %v256 = vpop.permute.xlu0 %255
    %v257 = vlaneseq
    %v258 = vshrl.u32 %v257, 7
    %v259 = vsub.s32 1, %v258
    %v260 = vrot.slane %v55, %v259
    %262 = vbcast.lane.b32.xlu0 %v260, 256
    %v263 = vpop.permute.xlu0 %262
    %s265 = sor.u32 256, 8
    %266 = vbcast.lane.b32.xlu0 %v260, %s265
    %v267 = vpop.permute.xlu0 %266
    %s269 = sor.u32 256, 16
    %270 = vbcast.lane.b32.xlu0 %v260, %s269
    %v271 = vpop.permute.xlu0 %270
    %s273 = sor.u32 256, 24
    %274 = vbcast.lane.b32.xlu0 %v260, %s273
    %v275 = vpop.permute.xlu0 %274
    %s277 = sor.u32 256, 32
    %278 = vbcast.lane.b32.xlu0 %v260, %s277
    %v279 = vpop.permute.xlu0 %278
    %s281 = sor.u32 256, 40
    %282 = vbcast.lane.b32.xlu0 %v260, %s281
    %v283 = vpop.permute.xlu0 %282
    %s285 = sor.u32 256, 48
    %286 = vbcast.lane.b32.xlu0 %v260, %s285
    %v287 = vpop.permute.xlu0 %286
    %s289 = sor.u32 256, 56
    %290 = vbcast.lane.b32.xlu0 %v260, %s289
    %v291 = vpop.permute.xlu0 %290
    %s293 = sor.u32 256, 64
    %294 = vbcast.lane.b32.xlu0 %v260, %s293
    %v295 = vpop.permute.xlu0 %294
    %s297 = sor.u32 256, 72
    %298 = vbcast.lane.b32.xlu0 %v260, %s297
    %v299 = vpop.permute.xlu0 %298
    %s301 = sor.u32 256, 80
    %302 = vbcast.lane.b32.xlu0 %v260, %s301
    %v303 = vpop.permute.xlu0 %302
    %s305 = sor.u32 256, 88
    %306 = vbcast.lane.b32.xlu0 %v260, %s305
    %v307 = vpop.permute.xlu0 %306
    %s309 = sor.u32 256, 96
    %310 = vbcast.lane.b32.xlu0 %v260, %s309
    %v311 = vpop.permute.xlu0 %310
    %s313 = sor.u32 256, 104
    %314 = vbcast.lane.b32.xlu0 %v260, %s313
    %v315 = vpop.permute.xlu0 %314
    %s317 = sor.u32 256, 112
    %318 = vbcast.lane.b32.xlu0 %v260, %s317
    %v319 = vpop.permute.xlu0 %318
    %s321 = sor.u32 256, 120
    %322 = vbcast.lane.b32.xlu0 %v260, %s321
    %v323 = vpop.permute.xlu0 %322
    %vm324 = vcmp.eq.s32.totalorder %v62, %v47
    %vm325 = vcmp.eq.s32.totalorder %v66, %v47
    %vm326 = vcmp.eq.s32.totalorder %v70, %v47
    %vm327 = vcmp.eq.s32.totalorder %v74, %v47
    %vm328 = vcmp.eq.s32.totalorder %v78, %v47
    %vm329 = vcmp.eq.s32.totalorder %v82, %v47
    %vm330 = vcmp.eq.s32.totalorder %v86, %v47
    %vm331 = vcmp.eq.s32.totalorder %v90, %v47
    %vm332 = vcmp.eq.s32.totalorder %v94, %v47
    %vm333 = vcmp.eq.s32.totalorder %v98, %v47
    %vm334 = vcmp.eq.s32.totalorder %v102, %v47
    %vm335 = vcmp.eq.s32.totalorder %v106, %v47
    %vm336 = vcmp.eq.s32.totalorder %v110, %v47
    %vm337 = vcmp.eq.s32.totalorder %v114, %v47
    %vm338 = vcmp.eq.s32.totalorder %v118, %v47
    %vm339 = vcmp.eq.s32.totalorder %v122, %v47
    %vm340 = vcmp.eq.s32.totalorder %v129, %v47
    %vm341 = vcmp.eq.s32.totalorder %v133, %v47
    %vm342 = vcmp.eq.s32.totalorder %v137, %v47
    %vm343 = vcmp.eq.s32.totalorder %v141, %v47
    %vm344 = vcmp.eq.s32.totalorder %v145, %v47
    %vm345 = vcmp.eq.s32.totalorder %v149, %v47
    %vm346 = vcmp.eq.s32.totalorder %v153, %v47
    %vm347 = vcmp.eq.s32.totalorder %v157, %v47
    %vm348 = vcmp.eq.s32.totalorder %v161, %v47
    %vm349 = vcmp.eq.s32.totalorder %v165, %v47
    %vm350 = vcmp.eq.s32.totalorder %v169, %v47
    %vm351 = vcmp.eq.s32.totalorder %v173, %v47
    %vm352 = vcmp.eq.s32.totalorder %v177, %v47
    %vm353 = vcmp.eq.s32.totalorder %v181, %v47
    %vm354 = vcmp.eq.s32.totalorder %v185, %v47
    %vm355 = vcmp.eq.s32.totalorder %v189, %v47
    %vm356 = vcmp.eq.s32.totalorder %v196, %v47
    %vm357 = vcmp.eq.s32.totalorder %v200, %v47
    %vm358 = vcmp.eq.s32.totalorder %v204, %v47
    %vm359 = vcmp.eq.s32.totalorder %v208, %v47
    %vm360 = vcmp.eq.s32.totalorder %v212, %v47
    %vm361 = vcmp.eq.s32.totalorder %v216, %v47
    %vm362 = vcmp.eq.s32.totalorder %v220, %v47
    %vm363 = vcmp.eq.s32.totalorder %v224, %v47
    %vm364 = vcmp.eq.s32.totalorder %v228, %v47
    %vm365 = vcmp.eq.s32.totalorder %v232, %v47
    %vm366 = vcmp.eq.s32.totalorder %v236, %v47
    %vm367 = vcmp.eq.s32.totalorder %v240, %v47
    %vm368 = vcmp.eq.s32.totalorder %v244, %v47
    %vm369 = vcmp.eq.s32.totalorder %v248, %v47
    %vm370 = vcmp.eq.s32.totalorder %v252, %v47
    %vm371 = vcmp.eq.s32.totalorder %v256, %v47
    %vm372 = vcmp.eq.s32.totalorder %v263, %v47
    %vm373 = vcmp.eq.s32.totalorder %v267, %v47
    %vm374 = vcmp.eq.s32.totalorder %v271, %v47
    %vm375 = vcmp.eq.s32.totalorder %v275, %v47
    %vm376 = vcmp.eq.s32.totalorder %v279, %v47
    %vm377 = vcmp.eq.s32.totalorder %v283, %v47
    %vm378 = vcmp.eq.s32.totalorder %v287, %v47
    %vm379 = vcmp.eq.s32.totalorder %v291, %v47
    %vm380 = vcmp.eq.s32.totalorder %v295, %v47
    %vm381 = vcmp.eq.s32.totalorder %v299, %v47
    %vm382 = vcmp.eq.s32.totalorder %v303, %v47
    %vm383 = vcmp.eq.s32.totalorder %v307, %v47
    %vm384 = vcmp.eq.s32.totalorder %v311, %v47
    %vm385 = vcmp.eq.s32.totalorder %v315, %v47
    %vm386 = vcmp.eq.s32.totalorder %v319, %v47
    %vm387 = vcmp.eq.s32.totalorder %v323, %v47
    %v389 = vunpack.c.l.s4 1983009808
    %v390 = vunpack.c.0.s8 %v389
    %v391 = vlaneseq
    %v392 = vshrl.u32 %v391, 7
    %v393 = vsub.s32 %v390, %v392
    %v394 = vrot.slane %v44, %v393
    %v395 = vcombine.high %v394, %v394
    %v396 = vlaneseq
    %v397 = vshrl.u32 %v396, 7
    %v398 = vsub.s32 0, %v397
    %v399 = vrot.slane %v394, %v398
    %401 = vbcast.lane.b32.xlu0 %v399, 256
    %v402 = vpop.permute.xlu0 %401
    %s404 = sor.u32 256, 8
    %405 = vbcast.lane.b32.xlu0 %v399, %s404
    %v406 = vpop.permute.xlu0 %405
    %s408 = sor.u32 256, 16
    %409 = vbcast.lane.b32.xlu0 %v399, %s408
    %v410 = vpop.permute.xlu0 %409
    %s412 = sor.u32 256, 24
    %413 = vbcast.lane.b32.xlu0 %v399, %s412
    %v414 = vpop.permute.xlu0 %413
    %s416 = sor.u32 256, 32
    %417 = vbcast.lane.b32.xlu0 %v399, %s416
    %v418 = vpop.permute.xlu0 %417
    %s420 = sor.u32 256, 40
    %421 = vbcast.lane.b32.xlu0 %v399, %s420
    %v422 = vpop.permute.xlu0 %421
    %s424 = sor.u32 256, 48
    %425 = vbcast.lane.b32.xlu0 %v399, %s424
    %v426 = vpop.permute.xlu0 %425
    %s428 = sor.u32 256, 56
    %429 = vbcast.lane.b32.xlu0 %v399, %s428
    %v430 = vpop.permute.xlu0 %429
    %s432 = sor.u32 256, 64
    %433 = vbcast.lane.b32.xlu0 %v399, %s432
    %v434 = vpop.permute.xlu0 %433
    %s436 = sor.u32 256, 72
    %437 = vbcast.lane.b32.xlu0 %v399, %s436
    %v438 = vpop.permute.xlu0 %437
    %s440 = sor.u32 256, 80
    %441 = vbcast.lane.b32.xlu0 %v399, %s440
    %v442 = vpop.permute.xlu0 %441
    %s444 = sor.u32 256, 88
    %445 = vbcast.lane.b32.xlu0 %v399, %s444
    %v446 = vpop.permute.xlu0 %445
    %s448 = sor.u32 256, 96
    %449 = vbcast.lane.b32.xlu0 %v399, %s448
    %v450 = vpop.permute.xlu0 %449
    %s452 = sor.u32 256, 104
    %453 = vbcast.lane.b32.xlu0 %v399, %s452
    %v454 = vpop.permute.xlu0 %453
    %s456 = sor.u32 256, 112
    %457 = vbcast.lane.b32.xlu0 %v399, %s456
    %v458 = vpop.permute.xlu0 %457
    %s460 = sor.u32 256, 120
    %461 = vbcast.lane.b32.xlu0 %v399, %s460
    %v462 = vpop.permute.xlu0 %461
    %v463 = vlaneseq
    %v464 = vshrl.u32 %v463, 7
    %v465 = vsub.s32 0, %v464
    %v466 = vrot.slane %v395, %v465
    %468 = vbcast.lane.b32.xlu0 %v466, 256
    %v469 = vpop.permute.xlu0 %468
    %s471 = sor.u32 256, 8
    %472 = vbcast.lane.b32.xlu0 %v466, %s471
    %v473 = vpop.permute.xlu0 %472
    %s475 = sor.u32 256, 16
    %476 = vbcast.lane.b32.xlu0 %v466, %s475
    %v477 = vpop.permute.xlu0 %476
    %s479 = sor.u32 256, 24
    %480 = vbcast.lane.b32.xlu0 %v466, %s479
    %v481 = vpop.permute.xlu0 %480
    %s483 = sor.u32 256, 32
    %484 = vbcast.lane.b32.xlu0 %v466, %s483
    %v485 = vpop.permute.xlu0 %484
    %s487 = sor.u32 256, 40
    %488 = vbcast.lane.b32.xlu0 %v466, %s487
    %v489 = vpop.permute.xlu0 %488
    %s491 = sor.u32 256, 48
    %492 = vbcast.lane.b32.xlu0 %v466, %s491
    %v493 = vpop.permute.xlu0 %492
    %s495 = sor.u32 256, 56
    %496 = vbcast.lane.b32.xlu0 %v466, %s495
    %v497 = vpop.permute.xlu0 %496
    %s499 = sor.u32 256, 64
    %500 = vbcast.lane.b32.xlu0 %v466, %s499
    %v501 = vpop.permute.xlu0 %500
    %s503 = sor.u32 256, 72
    %504 = vbcast.lane.b32.xlu0 %v466, %s503
    %v505 = vpop.permute.xlu0 %504
    %s507 = sor.u32 256, 80
    %508 = vbcast.lane.b32.xlu0 %v466, %s507
    %v509 = vpop.permute.xlu0 %508
    %s511 = sor.u32 256, 88
    %512 = vbcast.lane.b32.xlu0 %v466, %s511
    %v513 = vpop.permute.xlu0 %512
    %s515 = sor.u32 256, 96
    %516 = vbcast.lane.b32.xlu0 %v466, %s515
    %v517 = vpop.permute.xlu0 %516
    %s519 = sor.u32 256, 104
    %520 = vbcast.lane.b32.xlu0 %v466, %s519
    %v521 = vpop.permute.xlu0 %520
    %s523 = sor.u32 256, 112
    %524 = vbcast.lane.b32.xlu0 %v466, %s523
    %v525 = vpop.permute.xlu0 %524
    %s527 = sor.u32 256, 120
    %528 = vbcast.lane.b32.xlu0 %v466, %s527
    %v529 = vpop.permute.xlu0 %528
    %v530 = vlaneseq
    %v531 = vshrl.u32 %v530, 7
    %v532 = vsub.s32 1, %v531
    %v533 = vrot.slane %v394, %v532
    %535 = vbcast.lane.b32.xlu0 %v533, 256
    %v536 = vpop.permute.xlu0 %535
    %s538 = sor.u32 256, 8
    %539 = vbcast.lane.b32.xlu0 %v533, %s538
    %v540 = vpop.permute.xlu0 %539
    %s542 = sor.u32 256, 16
    %543 = vbcast.lane.b32.xlu0 %v533, %s542
    %v544 = vpop.permute.xlu0 %543
    %s546 = sor.u32 256, 24
    %547 = vbcast.lane.b32.xlu0 %v533, %s546
    %v548 = vpop.permute.xlu0 %547
    %s550 = sor.u32 256, 32
    %551 = vbcast.lane.b32.xlu0 %v533, %s550
    %v552 = vpop.permute.xlu0 %551
    %s554 = sor.u32 256, 40
    %555 = vbcast.lane.b32.xlu0 %v533, %s554
    %v556 = vpop.permute.xlu0 %555
    %s558 = sor.u32 256, 48
    %559 = vbcast.lane.b32.xlu0 %v533, %s558
    %v560 = vpop.permute.xlu0 %559
    %s562 = sor.u32 256, 56
    %563 = vbcast.lane.b32.xlu0 %v533, %s562
    %v564 = vpop.permute.xlu0 %563
    %s566 = sor.u32 256, 64
    %567 = vbcast.lane.b32.xlu0 %v533, %s566
    %v568 = vpop.permute.xlu0 %567
    %s570 = sor.u32 256, 72
    %571 = vbcast.lane.b32.xlu0 %v533, %s570
    %v572 = vpop.permute.xlu0 %571
    %s574 = sor.u32 256, 80
    %575 = vbcast.lane.b32.xlu0 %v533, %s574
    %v576 = vpop.permute.xlu0 %575
    %s578 = sor.u32 256, 88
    %579 = vbcast.lane.b32.xlu0 %v533, %s578
    %v580 = vpop.permute.xlu0 %579
    %s582 = sor.u32 256, 96
    %583 = vbcast.lane.b32.xlu0 %v533, %s582
    %v584 = vpop.permute.xlu0 %583
    %s586 = sor.u32 256, 104
    %587 = vbcast.lane.b32.xlu0 %v533, %s586
    %v588 = vpop.permute.xlu0 %587
    %s590 = sor.u32 256, 112
    %591 = vbcast.lane.b32.xlu0 %v533, %s590
    %v592 = vpop.permute.xlu0 %591
    %s594 = sor.u32 256, 120
    %595 = vbcast.lane.b32.xlu0 %v533, %s594
    %v596 = vpop.permute.xlu0 %595
    %v597 = vlaneseq
    %v598 = vshrl.u32 %v597, 7
    %v599 = vsub.s32 1, %v598
    %v600 = vrot.slane %v395, %v599
    %602 = vbcast.lane.b32.xlu0 %v600, 256
    %v603 = vpop.permute.xlu0 %602
    %s605 = sor.u32 256, 8
    %606 = vbcast.lane.b32.xlu0 %v600, %s605
    %v607 = vpop.permute.xlu0 %606
    %s609 = sor.u32 256, 16
    %610 = vbcast.lane.b32.xlu0 %v600, %s609
    %v611 = vpop.permute.xlu0 %610
    %s613 = sor.u32 256, 24
    %614 = vbcast.lane.b32.xlu0 %v600, %s613
    %v615 = vpop.permute.xlu0 %614
    %s617 = sor.u32 256, 32
    %618 = vbcast.lane.b32.xlu0 %v600, %s617
    %v619 = vpop.permute.xlu0 %618
    %s621 = sor.u32 256, 40
    %622 = vbcast.lane.b32.xlu0 %v600, %s621
    %v623 = vpop.permute.xlu0 %622
    %s625 = sor.u32 256, 48
    %626 = vbcast.lane.b32.xlu0 %v600, %s625
    %v627 = vpop.permute.xlu0 %626
    %s629 = sor.u32 256, 56
    %630 = vbcast.lane.b32.xlu0 %v600, %s629
    %v631 = vpop.permute.xlu0 %630
    %s633 = sor.u32 256, 64
    %634 = vbcast.lane.b32.xlu0 %v600, %s633
    %v635 = vpop.permute.xlu0 %634
    %s637 = sor.u32 256, 72
    %638 = vbcast.lane.b32.xlu0 %v600, %s637
    %v639 = vpop.permute.xlu0 %638
    %s641 = sor.u32 256, 80
    %642 = vbcast.lane.b32.xlu0 %v600, %s641
    %v643 = vpop.permute.xlu0 %642
    %s645 = sor.u32 256, 88
    %646 = vbcast.lane.b32.xlu0 %v600, %s645
    %v647 = vpop.permute.xlu0 %646
    %s649 = sor.u32 256, 96
    %650 = vbcast.lane.b32.xlu0 %v600, %s649
    %v651 = vpop.permute.xlu0 %650
    %s653 = sor.u32 256, 104
    %654 = vbcast.lane.b32.xlu0 %v600, %s653
    %v655 = vpop.permute.xlu0 %654
    %s657 = sor.u32 256, 112
    %658 = vbcast.lane.b32.xlu0 %v600, %s657
    %v659 = vpop.permute.xlu0 %658
    %s661 = sor.u32 256, 120
    %662 = vbcast.lane.b32.xlu0 %v600, %s661
    %v663 = vpop.permute.xlu0 %662
    %vm664 = vcmp.eq.s32.totalorder %v402, %v47
    %vm665 = vcmp.eq.s32.totalorder %v406, %v47
    %vm666 = vcmp.eq.s32.totalorder %v410, %v47
    %vm667 = vcmp.eq.s32.totalorder %v414, %v47
    %vm668 = vcmp.eq.s32.totalorder %v418, %v47
    %vm669 = vcmp.eq.s32.totalorder %v422, %v47
    %vm670 = vcmp.eq.s32.totalorder %v426, %v47
    %vm671 = vcmp.eq.s32.totalorder %v430, %v47
    %vm672 = vcmp.eq.s32.totalorder %v434, %v47
    %vm673 = vcmp.eq.s32.totalorder %v438, %v47
    %vm674 = vcmp.eq.s32.totalorder %v442, %v47
    %vm675 = vcmp.eq.s32.totalorder %v446, %v47
    %vm676 = vcmp.eq.s32.totalorder %v450, %v47
    %vm677 = vcmp.eq.s32.totalorder %v454, %v47
    %vm678 = vcmp.eq.s32.totalorder %v458, %v47
    %vm679 = vcmp.eq.s32.totalorder %v462, %v47
    %vm680 = vcmp.eq.s32.totalorder %v469, %v47
    %vm681 = vcmp.eq.s32.totalorder %v473, %v47
    %vm682 = vcmp.eq.s32.totalorder %v477, %v47
    %vm683 = vcmp.eq.s32.totalorder %v481, %v47
    %vm684 = vcmp.eq.s32.totalorder %v485, %v47
    %vm685 = vcmp.eq.s32.totalorder %v489, %v47
    %vm686 = vcmp.eq.s32.totalorder %v493, %v47
    %vm687 = vcmp.eq.s32.totalorder %v497, %v47
    %vm688 = vcmp.eq.s32.totalorder %v501, %v47
    %vm689 = vcmp.eq.s32.totalorder %v505, %v47
    %vm690 = vcmp.eq.s32.totalorder %v509, %v47
    %vm691 = vcmp.eq.s32.totalorder %v513, %v47
    %vm692 = vcmp.eq.s32.totalorder %v517, %v47
    %vm693 = vcmp.eq.s32.totalorder %v521, %v47
    %vm694 = vcmp.eq.s32.totalorder %v525, %v47
    %vm695 = vcmp.eq.s32.totalorder %v529, %v47
    %vm696 = vcmp.eq.s32.totalorder %v536, %v47
    %vm697 = vcmp.eq.s32.totalorder %v540, %v47
    %vm698 = vcmp.eq.s32.totalorder %v544, %v47
    %vm699 = vcmp.eq.s32.totalorder %v548, %v47
    %vm700 = vcmp.eq.s32.totalorder %v552, %v47
    %vm701 = vcmp.eq.s32.totalorder %v556, %v47
    %vm702 = vcmp.eq.s32.totalorder %v560, %v47
    %vm703 = vcmp.eq.s32.totalorder %v564, %v47
    %vm704 = vcmp.eq.s32.totalorder %v568, %v47
    %vm705 = vcmp.eq.s32.totalorder %v572, %v47
    %vm706 = vcmp.eq.s32.totalorder %v576, %v47
    %vm707 = vcmp.eq.s32.totalorder %v580, %v47
    %vm708 = vcmp.eq.s32.totalorder %v584, %v47
    %vm709 = vcmp.eq.s32.totalorder %v588, %v47
    %vm710 = vcmp.eq.s32.totalorder %v592, %v47
    %vm711 = vcmp.eq.s32.totalorder %v596, %v47
    %vm712 = vcmp.eq.s32.totalorder %v603, %v47
    %vm713 = vcmp.eq.s32.totalorder %v607, %v47
    %vm714 = vcmp.eq.s32.totalorder %v611, %v47
    %vm715 = vcmp.eq.s32.totalorder %v615, %v47
    %vm716 = vcmp.eq.s32.totalorder %v619, %v47
    %vm717 = vcmp.eq.s32.totalorder %v623, %v47
    %vm718 = vcmp.eq.s32.totalorder %v627, %v47
    %vm719 = vcmp.eq.s32.totalorder %v631, %v47
    %vm720 = vcmp.eq.s32.totalorder %v635, %v47
    %vm721 = vcmp.eq.s32.totalorder %v639, %v47
    %vm722 = vcmp.eq.s32.totalorder %v643, %v47
    %vm723 = vcmp.eq.s32.totalorder %v647, %v47
    %vm724 = vcmp.eq.s32.totalorder %v651, %v47
    %vm725 = vcmp.eq.s32.totalorder %v655, %v47
    %vm726 = vcmp.eq.s32.totalorder %v659, %v47
    %vm727 = vcmp.eq.s32.totalorder %v663, %v47
    %v728 = vld [vmem:[#allocation2] sm:$0x3]
    %vm729 = vmand %vm324, %vm664
    %vm730 = vmand %vm325, %vm665
    %vm731 = vmand %vm326, %vm666
    %vm732 = vmand %vm327, %vm667
    %vm733 = vmand %vm328, %vm668
    %vm734 = vmand %vm329, %vm669
    %vm735 = vmand %vm330, %vm670
    %vm736 = vmand %vm331, %vm671
    %vm737 = vmand %vm332, %vm672
    %vm738 = vmand %vm333, %vm673
    %vm739 = vmand %vm334, %vm674
    %vm740 = vmand %vm335, %vm675
    %vm741 = vmand %vm336, %vm676
    %vm742 = vmand %vm337, %vm677
    %vm743 = vmand %vm338, %vm678
    %vm744 = vmand %vm339, %vm679
    %vm745 = vmand %vm340, %vm680
    %vm746 = vmand %vm341, %vm681
    %vm747 = vmand %vm342, %vm682
    %vm748 = vmand %vm343, %vm683
    %vm749 = vmand %vm344, %vm684
    %vm750 = vmand %vm345, %vm685
    %vm751 = vmand %vm346, %vm686
    %vm752 = vmand %vm347, %vm687
    %vm753 = vmand %vm348, %vm688
    %vm754 = vmand %vm349, %vm689
    %vm755 = vmand %vm350, %vm690
    %vm756 = vmand %vm351, %vm691
    %vm757 = vmand %vm352, %vm692
    %vm758 = vmand %vm353, %vm693
    %vm759 = vmand %vm354, %vm694
    %vm760 = vmand %vm355, %vm695
    %vm761 = vmand %vm356, %vm696
    %vm762 = vmand %vm357, %vm697
    %vm763 = vmand %vm358, %vm698
    %vm764 = vmand %vm359, %vm699
    %vm765 = vmand %vm360, %vm700
    %vm766 = vmand %vm361, %vm701
    %vm767 = vmand %vm362, %vm702
    %vm768 = vmand %vm363, %vm703
    %vm769 = vmand %vm364, %vm704
    %vm770 = vmand %vm365, %vm705
    %vm771 = vmand %vm366, %vm706
    %vm772 = vmand %vm367, %vm707
    %vm773 = vmand %vm368, %vm708
    %vm774 = vmand %vm369, %vm709
    %vm775 = vmand %vm370, %vm710
    %vm776 = vmand %vm371, %vm711
    %vm777 = vmand %vm372, %vm712
    %vm778 = vmand %vm373, %vm713
    %vm779 = vmand %vm374, %vm714
    %vm780 = vmand %vm375, %vm715
    %vm781 = vmand %vm376, %vm716
    %vm782 = vmand %vm377, %vm717
    %vm783 = vmand %vm378, %vm718
    %vm784 = vmand %vm379, %vm719
    %vm785 = vmand %vm380, %vm720
    %vm786 = vmand %vm381, %vm721
    %vm787 = vmand %vm382, %vm722
    %vm788 = vmand %vm383, %vm723
    %vm789 = vmand %vm384, %vm724
    %vm790 = vmand %vm385, %vm725
    %vm791 = vmand %vm386, %vm726
    %vm792 = vmand %vm387, %vm727
    %v793 = vsel %vm729, 1, 0
    %v794 = vsel %vm730, 1, 0
    %v795 = vsel %vm731, 1, 0
    %v796 = vsel %vm732, 1, 0
    %v797 = vsel %vm733, 1, 0
    %v798 = vsel %vm734, 1, 0
    %v799 = vsel %vm735, 1, 0
    %v800 = vsel %vm736, 1, 0
    %v801 = vsel %vm737, 1, 0
    %v802 = vsel %vm738, 1, 0
    %v803 = vsel %vm739, 1, 0
    %v804 = vsel %vm740, 1, 0
    %v805 = vsel %vm741, 1, 0
    %v806 = vsel %vm742, 1, 0
    %v807 = vsel %vm743, 1, 0
    %v808 = vsel %vm744, 1, 0
    %v809 = vsel %vm745, 1, 0
    %v810 = vsel %vm746, 1, 0
    %v811 = vsel %vm747, 1, 0
    %v812 = vsel %vm748, 1, 0
    %v813 = vsel %vm749, 1, 0
    %v814 = vsel %vm750, 1, 0
    %v815 = vsel %vm751, 1, 0
    %v816 = vsel %vm752, 1, 0
    %v817 = vsel %vm753, 1, 0
    %v818 = vsel %vm754, 1, 0
    %v819 = vsel %vm755, 1, 0
    %v820 = vsel %vm756, 1, 0
    %v821 = vsel %vm757, 1, 0
    %v822 = vsel %vm758, 1, 0
    %v823 = vsel %vm759, 1, 0
    %v824 = vsel %vm760, 1, 0
    %v825 = vsel %vm761, 1, 0
    %v826 = vsel %vm762, 1, 0
    %v827 = vsel %vm763, 1, 0
    %v828 = vsel %vm764, 1, 0
    %v829 = vsel %vm765, 1, 0
    %v830 = vsel %vm766, 1, 0
    %v831 = vsel %vm767, 1, 0
    %v832 = vsel %vm768, 1, 0
    %v833 = vsel %vm769, 1, 0
    %v834 = vsel %vm770, 1, 0
    %v835 = vsel %vm771, 1, 0
    %v836 = vsel %vm772, 1, 0
    %v837 = vsel %vm773, 1, 0
    %v838 = vsel %vm774, 1, 0
    %v839 = vsel %vm775, 1, 0
    %v840 = vsel %vm776, 1, 0
    %v841 = vsel %vm777, 1, 0
    %v842 = vsel %vm778, 1, 0
    %v843 = vsel %vm779, 1, 0
    %v844 = vsel %vm780, 1, 0
    %v845 = vsel %vm781, 1, 0
    %v846 = vsel %vm782, 1, 0
    %v847 = vsel %vm783, 1, 0
    %v848 = vsel %vm784, 1, 0
    %v849 = vsel %vm785, 1, 0
    %v850 = vsel %vm786, 1, 0
    %v851 = vsel %vm787, 1, 0
    %v852 = vsel %vm788, 1, 0
    %v853 = vsel %vm789, 1, 0
    %v854 = vsel %vm790, 1, 0
    %v855 = vsel %vm791, 1, 0
    %v856 = vsel %vm792, 1, 0
    %v857 = vadd.s32 %v793, %v795
    %v858 = vadd.s32 %v794, %v796
    %v859 = vadd.s32 %v857, %v797
    %v860 = vadd.s32 %v858, %v798
    %v861 = vadd.s32 %v859, %v799
    %v862 = vadd.s32 %v860, %v800
    %v863 = vadd.s32 %v861, %v801
    %v864 = vadd.s32 %v862, %v802
    %v865 = vadd.s32 %v863, %v803
    %v866 = vadd.s32 %v864, %v804
    %v867 = vadd.s32 %v865, %v805
    %v868 = vadd.s32 %v866, %v806
    %v869 = vadd.s32 %v867, %v807
    %v870 = vadd.s32 %v868, %v808
    %v871 = vadd.s32 %v869, %v809
    %v872 = vadd.s32 %v870, %v810
    %v873 = vadd.s32 %v871, %v811
    %v874 = vadd.s32 %v872, %v812
    %v875 = vadd.s32 %v873, %v813
    %v876 = vadd.s32 %v874, %v814
    %v877 = vadd.s32 %v875, %v815
    %v878 = vadd.s32 %v876, %v816
    %v879 = vadd.s32 %v877, %v817
    %v880 = vadd.s32 %v878, %v818
    %v881 = vadd.s32 %v879, %v819
    %v882 = vadd.s32 %v880, %v820
    %v883 = vadd.s32 %v881, %v821
    %v884 = vadd.s32 %v882, %v822
    %v885 = vadd.s32 %v883, %v823
    %v886 = vadd.s32 %v884, %v824
    %v887 = vadd.s32 %v885, %v886
    %v888 = vrot.slane %v887, 4
    %v889 = vadd.s32 %v887, %v888
    %v890 = vrot.slane %v889, 2
    %v891 = vadd.s32 %v889, %v890
    %v892 = vrot.slane %v891, 1
    %v893 = vadd.s32 %v891, %v892
    %v894 = vadd.s32 %v825, %v827
    %v895 = vadd.s32 %v826, %v828
    %v896 = vadd.s32 %v894, %v829
    %v897 = vadd.s32 %v895, %v830
    %v898 = vadd.s32 %v896, %v831
    %v899 = vadd.s32 %v897, %v832
    %v900 = vadd.s32 %v898, %v833
    %v901 = vadd.s32 %v899, %v834
    %v902 = vadd.s32 %v900, %v835
    %v903 = vadd.s32 %v901, %v836
    %v904 = vadd.s32 %v902, %v837
    %v905 = vadd.s32 %v903, %v838
    %v906 = vadd.s32 %v904, %v839
    %v907 = vadd.s32 %v905, %v840
    %v908 = vadd.s32 %v906, %v841
    %v909 = vadd.s32 %v907, %v842
    %v910 = vadd.s32 %v908, %v843
    %v911 = vadd.s32 %v909, %v844
    %v912 = vadd.s32 %v910, %v845
    %v913 = vadd.s32 %v911, %v846
    %v914 = vadd.s32 %v912, %v847
    %v915 = vadd.s32 %v913, %v848
    %v916 = vadd.s32 %v914, %v849
    %v917 = vadd.s32 %v915, %v850
    %v918 = vadd.s32 %v916, %v851
    %v919 = vadd.s32 %v917, %v852
    %v920 = vadd.s32 %v918, %v853
    %v921 = vadd.s32 %v919, %v854
    %v922 = vadd.s32 %v920, %v855
    %v923 = vadd.s32 %v921, %v856
    %v924 = vadd.s32 %v922, %v923
    %v925 = vrot.slane %v924, 4
    %v926 = vadd.s32 %v924, %v925
    %v927 = vrot.slane %v926, 2
    %v928 = vadd.s32 %v926, %v927
    %v929 = vrot.slane %v928, 1
    %v930 = vadd.s32 %v928, %v929
    %vm931 = vcmask 1041409
    %v932 = vsel %vm931, %v930, %v893
    %v933 = vadd.s32 %v728, %v932
    %934 = vst [vmem:[#allocation2] sm:$0x3] %v933
    %v935 = vld [vmem:[#allocation3] sm:$0x3]
    %v936 = vsel %vm324, 1, 0
    %v937 = vsel %vm325, 1, 0
    %v938 = vsel %vm326, 1, 0
    %v939 = vsel %vm327, 1, 0
    %v940 = vsel %vm328, 1, 0
    %v941 = vsel %vm329, 1, 0
    %v942 = vsel %vm330, 1, 0
    %v943 = vsel %vm331, 1, 0
    %v944 = vsel %vm332, 1, 0
    %v945 = vsel %vm333, 1, 0
    %v946 = vsel %vm334, 1, 0
    %v947 = vsel %vm335, 1, 0
    %v948 = vsel %vm336, 1, 0
    %v949 = vsel %vm337, 1, 0
    %v950 = vsel %vm338, 1, 0
    %v951 = vsel %vm339, 1, 0
    %v952 = vsel %vm340, 1, 0
    %v953 = vsel %vm341, 1, 0
    %v954 = vsel %vm342, 1, 0
    %v955 = vsel %vm343, 1, 0
    %v956 = vsel %vm344, 1, 0
    %v957 = vsel %vm345, 1, 0
    %v958 = vsel %vm346, 1, 0
    %v959 = vsel %vm347, 1, 0
    %v960 = vsel %vm348, 1, 0
    %v961 = vsel %vm349, 1, 0
    %v962 = vsel %vm350, 1, 0
    %v963 = vsel %vm351, 1, 0
    %v964 = vsel %vm352, 1, 0
    %v965 = vsel %vm353, 1, 0
    %v966 = vsel %vm354, 1, 0
    %v967 = vsel %vm355, 1, 0
    %v968 = vsel %vm356, 1, 0
    %v969 = vsel %vm357, 1, 0
    %v970 = vsel %vm358, 1, 0
    %v971 = vsel %vm359, 1, 0
    %v972 = vsel %vm360, 1, 0
    %v973 = vsel %vm361, 1, 0
    %v974 = vsel %vm362, 1, 0
    %v975 = vsel %vm363, 1, 0
    %v976 = vsel %vm364, 1, 0
    %v977 = vsel %vm365, 1, 0
    %v978 = vsel %vm366, 1, 0
    %v979 = vsel %vm367, 1, 0
    %v980 = vsel %vm368, 1, 0
    %v981 = vsel %vm369, 1, 0
    %v982 = vsel %vm370, 1, 0
    %v983 = vsel %vm371, 1, 0
    %v984 = vsel %vm372, 1, 0
    %v985 = vsel %vm373, 1, 0
    %v986 = vsel %vm374, 1, 0
    %v987 = vsel %vm375, 1, 0
    %v988 = vsel %vm376, 1, 0
    %v989 = vsel %vm377, 1, 0
    %v990 = vsel %vm378, 1, 0
    %v991 = vsel %vm379, 1, 0
    %v992 = vsel %vm380, 1, 0
    %v993 = vsel %vm381, 1, 0
    %v994 = vsel %vm382, 1, 0
    %v995 = vsel %vm383, 1, 0
    %v996 = vsel %vm384, 1, 0
    %v997 = vsel %vm385, 1, 0
    %v998 = vsel %vm386, 1, 0
    %v999 = vsel %vm387, 1, 0
    %v1000 = vadd.s32 %v936, %v938
    %v1001 = vadd.s32 %v937, %v939
    %v1002 = vadd.s32 %v1000, %v940
    %v1003 = vadd.s32 %v1001, %v941
    %v1004 = vadd.s32 %v1002, %v942
    %v1005 = vadd.s32 %v1003, %v943
    %v1006 = vadd.s32 %v1004, %v944
    %v1007 = vadd.s32 %v1005, %v945
    %v1008 = vadd.s32 %v1006, %v946
    %v1009 = vadd.s32 %v1007, %v947
    %v1010 = vadd.s32 %v1008, %v948
    %v1011 = vadd.s32 %v1009, %v949
    %v1012 = vadd.s32 %v1010, %v950
    %v1013 = vadd.s32 %v1011, %v951
    %v1014 = vadd.s32 %v1012, %v952
    %v1015 = vadd.s32 %v1013, %v953
    %v1016 = vadd.s32 %v1014, %v954
    %v1017 = vadd.s32 %v1015, %v955
    %v1018 = vadd.s32 %v1016, %v956
    %v1019 = vadd.s32 %v1017, %v957
    %v1020 = vadd.s32 %v1018, %v958
    %v1021 = vadd.s32 %v1019, %v959
    %v1022 = vadd.s32 %v1020, %v960
    %v1023 = vadd.s32 %v1021, %v961
    %v1024 = vadd.s32 %v1022, %v962
    %v1025 = vadd.s32 %v1023, %v963
    %v1026 = vadd.s32 %v1024, %v964
    %v1027 = vadd.s32 %v1025, %v965
    %v1028 = vadd.s32 %v1026, %v966
    %v1029 = vadd.s32 %v1027, %v967
    %v1030 = vadd.s32 %v1028, %v1029
    %v1031 = vrot.slane %v1030, 4
    %v1032 = vadd.s32 %v1030, %v1031
    %v1033 = vrot.slane %v1032, 2
    %v1034 = vadd.s32 %v1032, %v1033
    %v1035 = vrot.slane %v1034, 1
    %v1036 = vadd.s32 %v1034, %v1035
    %v1037 = vadd.s32 %v968, %v970
    %v1038 = vadd.s32 %v969, %v971
    %v1039 = vadd.s32 %v1037, %v972
    %v1040 = vadd.s32 %v1038, %v973
    %v1041 = vadd.s32 %v1039, %v974
    %v1042 = vadd.s32 %v1040, %v975
    %v1043 = vadd.s32 %v1041, %v976
    %v1044 = vadd.s32 %v1042, %v977
    %v1045 = vadd.s32 %v1043, %v978
    %v1046 = vadd.s32 %v1044, %v979
    %v1047 = vadd.s32 %v1045, %v980
    %v1048 = vadd.s32 %v1046, %v981
    %v1049 = vadd.s32 %v1047, %v982
    %v1050 = vadd.s32 %v1048, %v983
    %v1051 = vadd.s32 %v1049, %v984
    %v1052 = vadd.s32 %v1050, %v985
    %v1053 = vadd.s32 %v1051, %v986
    %v1054 = vadd.s32 %v1052, %v987
    %v1055 = vadd.s32 %v1053, %v988
    %v1056 = vadd.s32 %v1054, %v989
    %v1057 = vadd.s32 %v1055, %v990
    %v1058 = vadd.s32 %v1056, %v991
    %v1059 = vadd.s32 %v1057, %v992
    %v1060 = vadd.s32 %v1058, %v993
    %v1061 = vadd.s32 %v1059, %v994
    %v1062 = vadd.s32 %v1060, %v995
    %v1063 = vadd.s32 %v1061, %v996
    %v1064 = vadd.s32 %v1062, %v997
    %v1065 = vadd.s32 %v1063, %v998
    %v1066 = vadd.s32 %v1064, %v999
    %v1067 = vadd.s32 %v1065, %v1066
    %v1068 = vrot.slane %v1067, 4
    %v1069 = vadd.s32 %v1067, %v1068
    %v1070 = vrot.slane %v1069, 2
    %v1071 = vadd.s32 %v1069, %v1070
    %v1072 = vrot.slane %v1071, 1
    %v1073 = vadd.s32 %v1071, %v1072
    %v1074 = vsel %vm931, %v1073, %v1036
    %v1075 = vadd.s32 %v935, %v1074
    %1076 = vst [vmem:[#allocation3] sm:$0x3] %v1075
    %v1077 = vld [vmem:[#allocation4] sm:$0x3]
    %v1078 = vsel %vm664, 1, 0
    %v1079 = vsel %vm665, 1, 0
    %v1080 = vsel %vm666, 1, 0
    %v1081 = vsel %vm667, 1, 0
    %v1082 = vsel %vm668, 1, 0
    %v1083 = vsel %vm669, 1, 0
    %v1084 = vsel %vm670, 1, 0
    %v1085 = vsel %vm671, 1, 0
    %v1086 = vsel %vm672, 1, 0
    %v1087 = vsel %vm673, 1, 0
    %v1088 = vsel %vm674, 1, 0
    %v1089 = vsel %vm675, 1, 0
    %v1090 = vsel %vm676, 1, 0
    %v1091 = vsel %vm677, 1, 0
    %v1092 = vsel %vm678, 1, 0
    %v1093 = vsel %vm679, 1, 0
    %v1094 = vsel %vm680, 1, 0
    %v1095 = vsel %vm681, 1, 0
    %v1096 = vsel %vm682, 1, 0
    %v1097 = vsel %vm683, 1, 0
    %v1098 = vsel %vm684, 1, 0
    %v1099 = vsel %vm685, 1, 0
    %v1100 = vsel %vm686, 1, 0
    %v1101 = vsel %vm687, 1, 0
    %v1102 = vsel %vm688, 1, 0
    %v1103 = vsel %vm689, 1, 0
    %v1104 = vsel %vm690, 1, 0
    %v1105 = vsel %vm691, 1, 0
    %v1106 = vsel %vm692, 1, 0
    %v1107 = vsel %vm693, 1, 0
    %v1108 = vsel %vm694, 1, 0
    %v1109 = vsel %vm695, 1, 0
    %v1110 = vsel %vm696, 1, 0
    %v1111 = vsel %vm697, 1, 0
    %v1112 = vsel %vm698, 1, 0
    %v1113 = vsel %vm699, 1, 0
    %v1114 = vsel %vm700, 1, 0
    %v1115 = vsel %vm701, 1, 0
    %v1116 = vsel %vm702, 1, 0
    %v1117 = vsel %vm703, 1, 0
    %v1118 = vsel %vm704, 1, 0
    %v1119 = vsel %vm705, 1, 0
    %v1120 = vsel %vm706, 1, 0
    %v1121 = vsel %vm707, 1, 0
    %v1122 = vsel %vm708, 1, 0
    %v1123 = vsel %vm709, 1, 0
    %v1124 = vsel %vm710, 1, 0
    %v1125 = vsel %vm711, 1, 0
    %v1126 = vsel %vm712, 1, 0
    %v1127 = vsel %vm713, 1, 0
    %v1128 = vsel %vm714, 1, 0
    %v1129 = vsel %vm715, 1, 0
    %v1130 = vsel %vm716, 1, 0
    %v1131 = vsel %vm717, 1, 0
    %v1132 = vsel %vm718, 1, 0
    %v1133 = vsel %vm719, 1, 0
    %v1134 = vsel %vm720, 1, 0
    %v1135 = vsel %vm721, 1, 0
    %v1136 = vsel %vm722, 1, 0
    %v1137 = vsel %vm723, 1, 0
    %v1138 = vsel %vm724, 1, 0
    %v1139 = vsel %vm725, 1, 0
    %v1140 = vsel %vm726, 1, 0
    %v1141 = vsel %vm727, 1, 0
    %v1142 = vadd.s32 %v1078, %v1080
    %v1143 = vadd.s32 %v1079, %v1081
    %v1144 = vadd.s32 %v1142, %v1082
    %v1145 = vadd.s32 %v1143, %v1083
    %v1146 = vadd.s32 %v1144, %v1084
    %v1147 = vadd.s32 %v1145, %v1085
    %v1148 = vadd.s32 %v1146, %v1086
    %v1149 = vadd.s32 %v1147, %v1087
    %v1150 = vadd.s32 %v1148, %v1088
    %v1151 = vadd.s32 %v1149, %v1089
    %v1152 = vadd.s32 %v1150, %v1090
    %v1153 = vadd.s32 %v1151, %v1091
    %v1154 = vadd.s32 %v1152, %v1092
    %v1155 = vadd.s32 %v1153, %v1093
    %v1156 = vadd.s32 %v1154, %v1094
    %v1157 = vadd.s32 %v1155, %v1095
    %v1158 = vadd.s32 %v1156, %v1096
    %v1159 = vadd.s32 %v1157, %v1097
    %v1160 = vadd.s32 %v1158, %v1098
    %v1161 = vadd.s32 %v1159, %v1099
    %v1162 = vadd.s32 %v1160, %v1100
    %v1163 = vadd.s32 %v1161, %v1101
    %v1164 = vadd.s32 %v1162, %v1102
    %v1165 = vadd.s32 %v1163, %v1103
    %v1166 = vadd.s32 %v1164, %v1104
    %v1167 = vadd.s32 %v1165, %v1105
    %v1168 = vadd.s32 %v1166, %v1106
    %v1169 = vadd.s32 %v1167, %v1107
    %v1170 = vadd.s32 %v1168, %v1108
    %v1171 = vadd.s32 %v1169, %v1109
    %v1172 = vadd.s32 %v1170, %v1171
    %v1173 = vrot.slane %v1172, 4
    %v1174 = vadd.s32 %v1172, %v1173
    %v1175 = vrot.slane %v1174, 2
    %v1176 = vadd.s32 %v1174, %v1175
    %v1177 = vrot.slane %v1176, 1
    %v1178 = vadd.s32 %v1176, %v1177
    %v1179 = vadd.s32 %v1110, %v1112
    %v1180 = vadd.s32 %v1111, %v1113
    %v1181 = vadd.s32 %v1179, %v1114
    %v1182 = vadd.s32 %v1180, %v1115
    %v1183 = vadd.s32 %v1181, %v1116
    %v1184 = vadd.s32 %v1182, %v1117
    %v1185 = vadd.s32 %v1183, %v1118
    %v1186 = vadd.s32 %v1184, %v1119
    %v1187 = vadd.s32 %v1185, %v1120
    %v1188 = vadd.s32 %v1186, %v1121
    %v1189 = vadd.s32 %v1187, %v1122
    %v1190 = vadd.s32 %v1188, %v1123
    %v1191 = vadd.s32 %v1189, %v1124
    %v1192 = vadd.s32 %v1190, %v1125
    %v1193 = vadd.s32 %v1191, %v1126
    %v1194 = vadd.s32 %v1192, %v1127
    %v1195 = vadd.s32 %v1193, %v1128
    %v1196 = vadd.s32 %v1194, %v1129
    %v1197 = vadd.s32 %v1195, %v1130
    %v1198 = vadd.s32 %v1196, %v1131
    %v1199 = vadd.s32 %v1197, %v1132
    %v1200 = vadd.s32 %v1198, %v1133
    %v1201 = vadd.s32 %v1199, %v1134
    %v1202 = vadd.s32 %v1200, %v1135
    %v1203 = vadd.s32 %v1201, %v1136
    %v1204 = vadd.s32 %v1202, %v1137
    %v1205 = vadd.s32 %v1203, %v1138
    %v1206 = vadd.s32 %v1204, %v1139
    %v1207 = vadd.s32 %v1205, %v1140
    %v1208 = vadd.s32 %v1206, %v1141
    %v1209 = vadd.s32 %v1207, %v1208
    %v1210 = vrot.slane %v1209, 4
    %v1211 = vadd.s32 %v1209, %v1210
    %v1212 = vrot.slane %v1211, 2
    %v1213 = vadd.s32 %v1211, %v1212
    %v1214 = vrot.slane %v1213, 1
    %v1215 = vadd.s32 %v1213, %v1214
    %v1216 = vsel %vm931, %v1215, %v1178
    %v1217 = vadd.s32 %v1077, %v1216
    %1218 = vst [vmem:[#allocation4] sm:$0x3] %v1217
    // Predicated region
    $region22: #{tpu_custom_call.1} parent=1 // pred_check
      %p1219 = pneg %p36
    $region23: #{tpu_custom_call.1} parent=1 // pred_check_branch
      %1221 = sbr.rel (%p1219) target = $region25
    $region24: #{tpu_custom_call.1} parent=1 // pred_region
      %v1222 = vld [vmem:[#allocation2] sm:$0x3]
      %v1223 = vcvt.s32.f32 %v1222
      %v1224 = vld [vmem:[#allocation3] sm:$0x3]
      %v1225 = vcvt.s32.f32 %v1224
      %v1226 = vld [vmem:[#allocation4] sm:$0x3]
      %v1227 = vcvt.s32.f32 %v1226
      %v1228 = vadd.f32 %v1223, 0.01
      %v1229 = vadd.f32 %v1225, %v1227
      %v1230 = vsub.f32 %v1229, %v1223
      %v1231 = vadd.f32 %v1230, 0.01
      %v1232 = vrcp.pop %v1231
      %v1233 = vmul.f32 %v1228, %v1232
      %vm1234 = vcmp.lt.s32.totalorder %v46, 20
      %v1235 = vsel %vm1234, %v1233, 0.0
      %vm1236 = vcmask 1041408
      %v1237 = vsel %vm1236, %v1235, 0.0
      %1238 = vadd.xlane.f32.xlu0 %v1237
      %v1239 = vpop.xlane.xlu0 %1238
      %v1240 = vrot.slane %v1239, 4
      %v1241 = vadd.f32 %v1239, %v1240
      %v1242 = vrot.slane %v1241, 2
      %v1243 = vadd.f32 %v1241, %v1242
      %v1244 = vrot.slane %v1243, 1
      %v1245 = vadd.f32 %v1243, %v1244
      %s1246 = vtos %v1245
      %v1247 = vrcp.pop 40.0
      %s1248 = vtos %v1247
      %s1249 = smul.f32 %s1246, %s1248
      %s1250 = scalar_lea.smem [#allocation10], 0
      %1251 = sst [smem:[%s1250]] %s1249
    $region25: #{tpu_custom_call.1} parent=1 // pred_fallthru
      _
    // Predicated region
    $region26: #{tpu_custom_call.1} parent=1 // pred_check
      _
    $region27: #{tpu_custom_call.1} parent=1 // pred_check_branch
      %1253 = sbr.rel (0) target = $region29
    $region28: #{tpu_custom_call.1} parent=1 // pred_region
      %s1255 = ssub.s32 16, 16
      %1256 = vsyncadd [#allocation7], %s1255
      %1259 = dma.smem_to_hbm [#allocation10], 16, %s2, [#allocation7]
    $region29: #{tpu_custom_call.1} parent=1 // pred_fallthru
      _
    // Predicated region
    $region30: #{tpu_custom_call.1} parent=1 // pred_check
      _
    $region31: #{tpu_custom_call.1} parent=1 // pred_check_branch
      %1261 = sbr.rel (0) target = $region33
    $region32: #{tpu_custom_call.1} parent=1 // pred_region
      %1262 = dma.done [#allocation7], 16
    $region33: #{tpu_custom_call.1} parent=1 // pred_fallthru
      _
    %1263 = sfence
    %1264 = vsyncpa [#allocation6], 1
    %1265 = vsyncpa [#allocation9], 1
    %1266 = vsyncpa [#allocation7], 1

</llo_original>
